<compile_context>
chip_gen: v6e
topology: v6e:2x2x1
jax: 0.10.0
libtpu: 0.0.40
codegen_flags: <defaults>
</compile_context>

<pallas_src>
import functools

import jax
import jax.numpy as jnp
from jax.experimental import pallas as pl
from jax.experimental.pallas import tpu as pltpu

LANE = 128
ACC_ROWS = 8                   # accumulator tile = one (8, 128) f32 vreg
MAX_BLOCK_ROWS = 4096          # (4096, 128) f32 = 2 MiB per input per step
VMEM_LIMIT_BYTES = 48 * 1024 * 1024


def _num_tensorcores() -> int:
    """2 on v7x-style chips (independent per-TC HBM paths); 1 elsewhere."""
    try:
        kind = jax.devices()[0].device_kind.lower()
    except Exception:
        return 1
    if "v7" in kind or "7x" in kind:
        return 2
    return 1


def _masked_l1_kernel(p_ref, t_ref, sum_ref, cnt_ref, *,
                      rows, block_rows, blocks_per_shard, num_shards,
                      partial_possible):
    if num_shards == 1:
        s = 0
        i = pl.program_id(0)
    else:
        s = pl.program_id(0)          # CORE_PARALLEL axis (one TC per shard)
        i = pl.program_id(1)          # reduction axis ("arbitrary")

    # Output blocks stay resident across the reduction axis (same block index
    # for every i), so they act as per-shard accumulators.
    @pl.when(i == 0)
    def _():
        sum_ref[...] = jnp.zeros_like(sum_ref)
        cnt_ref[...] = jnp.zeros_like(cnt_ref)

    p = p_ref[...].astype(jnp.float32)
    t = t_ref[...].astype(jnp.float32)

    folds = block_rows // ACC_ROWS
    rem_rows = block_rows % ACC_ROWS

    def accumulate(valid):
        # jnp.where (select) does not propagate NaN/garbage from the masked
        # branch, so NaN targets and out-of-range garbage rows contribute 0.
        contrib = jnp.where(valid, jnp.abs(p - t), 0.0)
        cnt = valid.astype(jnp.float32)
        if folds > 0:
            head = folds * ACC_ROWS
            # Leading-axis reduction: pure VPU vreg adds, no XLU.
            sum_ref[...] += jnp.sum(
                contrib[:head].reshape(folds, ACC_ROWS, LANE), axis=0)
            cnt_ref[...] += jnp.sum(
                cnt[:head].reshape(folds, ACC_ROWS, LANE), axis=0)
        if rem_rows:
            sum_ref[:rem_rows, :] += contrib[folds * ACC_ROWS:]
            cnt_ref[:rem_rows, :] += cnt[folds * ACC_ROWS:]

    full_blocks = rows // block_rows          # blocks with no ragged rows
    logical_block = s * blocks_per_shard + i

    if partial_possible:
        # Common path: block fully inside the array -> no row mask needed.
        @pl.when(logical_block < full_blocks)
        def _():
            accumulate(jnp.logical_not(jnp.isnan(t)))

        # Rare path: ragged last block or a clamped duplicate block from an
        # uneven shard split -> mask rows past the true row count.
        @pl.when(logical_block >= full_blocks)
        def _():
            row0 = logical_block * block_rows
            row_ids = row0 + jax.lax.broadcasted_iota(
                jnp.int32, (block_rows, LANE), 0)
            accumulate(jnp.logical_and(row_ids < rows,
                                       jnp.logical_not(jnp.isnan(t))))
    else:
        accumulate(jnp.logical_not(jnp.isnan(t)))


def _masked_l1_partial(p2, t2, *, max_block_rows):
    """Returns per-shard (8,128) partial sums and counts for a (rows,128) pair."""
    rows = p2.shape[0]
    block_rows = rows if rows <= max_block_rows else max_block_rows
    total_blocks = pl.cdiv(rows, block_rows)

    num_cores = _num_tensorcores()
    num_shards = num_cores if (num_cores > 1 and total_blocks >= num_cores) else 1
    blocks_per_shard = pl.cdiv(total_blocks, num_shards)

    partial_possible = (rows % block_rows != 0) or (
        num_shards * blocks_per_shard != total_blocks)

    kernel = functools.partial(
        _masked_l1_kernel,
        rows=rows, block_rows=block_rows, blocks_per_shard=blocks_per_shard,
        num_shards=num_shards, partial_possible=partial_possible)

    if num_shards == 1:
        grid = (blocks_per_shard,)
        in_map = lambda i: (i, 0)
        out_map = lambda i: (0, 0)
        dim_sem = ("arbitrary",)
    else:
        grid = (num_shards, blocks_per_shard)
        last = total_blocks - 1
        # Clamp so an uneven shard split never DMAs past the last block; the
        # kernel fully masks those duplicate iterations.
        in_map = lambda s, i: (jnp.minimum(s * blocks_per_shard + i, last), 0)
        out_map = lambda s, i: (s, 0)
        # Guaranteed split across the two TensorCores (each with its own HBM
        # path); the inner reduction axis stays "arbitrary".
        dim_sem = (pltpu.CORE_PARALLEL, pltpu.ARBITRARY)

    # NOTE: pipeline_mode=pl.Buffered(3) on the input specs is a 0-3% sweep
    # candidate once this is profiled on hardware; left at the default depth.
    return pl.pallas_call(
        kernel,
        out_shape=(
            jax.ShapeDtypeStruct((num_shards * ACC_ROWS, LANE), jnp.float32),
            jax.ShapeDtypeStruct((num_shards * ACC_ROWS, LANE), jnp.float32),
        ),
        grid_spec=pltpu.PrefetchScalarGridSpec(
            num_scalar_prefetch=0,
            grid=grid,
            in_specs=[pl.BlockSpec((block_rows, LANE), in_map),
                      pl.BlockSpec((block_rows, LANE), in_map)],
            out_specs=[pl.BlockSpec((ACC_ROWS, LANE), out_map),
                       pl.BlockSpec((ACC_ROWS, LANE), out_map)],
        ),
        compiler_params=pltpu.CompilerParams(
            dimension_semantics=dim_sem,
            vmem_limit_bytes=VMEM_LIMIT_BYTES),
    )(p2, t2)


def masked_l1_loss(predictions, targets, *, max_block_rows=MAX_BLOCK_ROWS):
    assert predictions.shape == targets.shape
    p_flat = predictions.reshape(-1)
    t_flat = targets.reshape(-1)
    n = p_flat.shape[0]

    n_aligned = (n // LANE) * LANE
    rows = n_aligned // LANE

    total_sum = jnp.float32(0.0)
    total_cnt = jnp.float32(0.0)

    if rows > 0:
        # 128-aligned prefix goes through the kernel. When n is already a
        # multiple of 128 (common case) this is a pure bitcast reshape; no
        # HBM copy of the inputs is ever made in the wrapper.
        if n_aligned == n:
            p_main, t_main = p_flat, t_flat
        else:
            p_main, t_main = p_flat[:n_aligned], t_flat[:n_aligned]
        psum, pcnt = _masked_l1_partial(
            p_main.reshape(rows, LANE), t_main.reshape(rows, LANE),
            max_block_rows=max_block_rows)
        total_sum = total_sum + jnp.sum(psum)
        total_cnt = total_cnt + jnp.sum(pcnt)

    if n_aligned < n:
        # <128-element ragged tail: trivial jnp reduction, negligible cost.
        tp = p_flat[n_aligned:].astype(jnp.float32)
        tt = t_flat[n_aligned:].astype(jnp.float32)
        tmask = jnp.logical_not(jnp.isnan(tt))
        total_sum = total_sum + jnp.sum(jnp.where(tmask, jnp.abs(tp - tt), 0.0))
        total_cnt = total_cnt + jnp.sum(tmask.astype(jnp.float32))

    # 0/0 -> NaN matches torch.mean over an empty selection.
    return total_sum / total_cnt


def _reference(predictions, targets):
    mask = jnp.logical_not(jnp.isnan(targets))
    diff = jnp.where(mask, jnp.abs(predictions - targets), 0.0)
    return jnp.sum(diff) / jnp.sum(mask.astype(jnp.float32))


def _check(shape, key, p_nan=0.3, rtol=1e-4, atol=1e-6, **kwargs):
    k_pred, k_targ, k_mask = jax.random.split(key, 3)
    predictions = jax.random.normal(k_pred, shape, dtype=jnp.float32)
    targets = jax.random.normal(k_targ, shape, dtype=jnp.float32)
    nan_mask = jax.random.bernoulli(k_mask, p=p_nan, shape=shape)
    targets = jnp.where(nan_mask, jnp.nan, targets)

    loss = jax.block_until_ready(masked_l1_loss(predictions, targets, **kwargs))
    ref = _reference(predictions, targets)
    assert jnp.allclose(loss, ref, rtol=rtol, atol=atol), (shape, loss, ref)


if __name__ == "__main__":
    key = jax.random.PRNGKey(0)
    k1, k2, k3, k4, k5, k6 = jax.random.split(key, 6)

    # Primary case: small NCHW input (2048 elems -> one full (16,128) block).
    _check((2, 4, 16, 16), k1)
    # Larger case: 5000 rows -> one full 4096-row block + a ragged last block.
    _check((4, 1250, 128), k2)
    # Element count not a multiple of 128 -> kernel prefix + jnp tail path,
    # and a 9-row block exercising the sub-8-row remainder accumulate.
    _check((3, 5, 7, 11), k3)
    # Fewer than 8 rows (640 elems) -> remainder-only accumulation path.
    _check((2, 4, 80), k4)
    # Fewer than 128 elems -> pure-jnp tail path, kernel skipped.
    _check((3, 7), k5)
    # Multi-block reduction with a small forced block size (covers the
    # resident-accumulator loop and, on 2-TC chips, the CORE_PARALLEL split).
    _check((2, 625, 128), k6, max_block_rows=128)

    print("KERNEL_OK")
</pallas_src>

<mosaic_0001>
module attributes {stable_mosaic.version = 11 : i64} {
  func.func @_masked_l1_kernel(%arg0: i32, %arg1: memref<16x128xf32, #tpu.memory_space<vmem>>, %arg2: memref<16x128xf32, #tpu.memory_space<vmem>>, %arg3: memref<8x128xf32, #tpu.memory_space<vmem>>, %arg4: memref<8x128xf32, #tpu.memory_space<vmem>>) attributes {dimension_semantics = [#tpu.dimension_semantics<arbitrary>], iteration_bounds = array<i64: 1>, scalar_prefetch = 0 : i64, scratch_operands = 0 : i64, tpu.core_type = #tpu.core_type<tc>, window_params = [{transform_indices = @transform_0, window_bounds = array<i64: 16, 128>}, {transform_indices = @transform_1, window_bounds = array<i64: 16, 128>}, {pipeline_mode = #tpu.pipeline_mode<synchronous>, transform_indices = @transform_2, window_bounds = array<i64: 8, 128>}, {pipeline_mode = #tpu.pipeline_mode<synchronous>, transform_indices = @transform_3, window_bounds = array<i64: 8, 128>}]} {
    %c0_i32 = arith.constant 0 : i32
    %0 = arith.cmpi eq, %arg0, %c0_i32 : i32
    %1 = arith.extui %0 : i1 to i32
    %c0_i32_0 = arith.constant 0 : i32
    %2 = arith.cmpi ne, %1, %c0_i32_0 : i32
    scf.if %2 {
      %cst_15 = arith.constant 0.000000e+00 : f32
      %23 = vector.broadcast %cst_15 : f32 to vector<8x128xf32>
      %c0_16 = arith.constant 0 : index
      %c0_17 = arith.constant 0 : index
      %24 = vector.load %arg3[%c0_16, %c0_17] : memref<8x128xf32, #tpu.memory_space<vmem>>, vector<8x128xf32>
      tpu.vector_store %arg3[%c0_16, %c0_17], %23 {strides = array<i32>} : memref<8x128xf32, #tpu.memory_space<vmem>>, vector<8x128xf32>,
      %cst_18 = arith.constant 0.000000e+00 : f32
      %25 = vector.broadcast %cst_18 : f32 to vector<8x128xf32>
      %c0_19 = arith.constant 0 : index
      %c0_20 = arith.constant 0 : index
      %26 = vector.load %arg4[%c0_19, %c0_20] : memref<8x128xf32, #tpu.memory_space<vmem>>, vector<8x128xf32>
      tpu.vector_store %arg4[%c0_19, %c0_20], %25 {strides = array<i32>} : memref<8x128xf32, #tpu.memory_space<vmem>>, vector<8x128xf32>,
    } else {
    }
    %c0 = arith.constant 0 : index
    %c0_1 = arith.constant 0 : index
    %3 = vector.load %arg1[%c0, %c0_1] : memref<16x128xf32, #tpu.memory_space<vmem>>, vector<16x128xf32>
    %c0_2 = arith.constant 0 : index
    %c0_3 = arith.constant 0 : index
    %4 = vector.load %arg2[%c0_2, %c0_3] : memref<16x128xf32, #tpu.memory_space<vmem>>, vector<16x128xf32>
    %5 = arith.cmpf one, %4, %4 : vector<16x128xf32>
    %cst = arith.constant dense<true> : vector<16x128xi1>
    %6 = arith.xori %5, %cst : vector<16x128xi1>
    %7 = arith.subf %3, %4 : vector<16x128xf32>
    %8 = math.absf %7 : vector<16x128xf32>
    %cst_4 = arith.constant 0.000000e+00 : f32
    %9 = vector.broadcast %cst_4 : f32 to vector<16x128xf32>
    %10 = arith.select %6, %8, %9 : vector<16x128xi1>, vector<16x128xf32>
    %11 = arith.extui %6 : vector<16x128xi1> to vector<16x128xi32>
    %12 = arith.sitofp %11 : vector<16x128xi32> to vector<16x128xf32>
    %c0_5 = arith.constant 0 : index
    %c0_6 = arith.constant 0 : index
    %13 = vector.load %arg3[%c0_5, %c0_6] : memref<8x128xf32, #tpu.memory_space<vmem>>, vector<8x128xf32>
    %14 = vector.shape_cast %10 : vector<16x128xf32> to vector<2x8x128xf32>
    %cst_7 = arith.constant dense<0.000000e+00> : vector<8x128xf32>
    %15 = vector.multi_reduction <add>, %14, %cst_7 [0] : vector<2x8x128xf32> to vector<8x128xf32>
    %16 = arith.addf %13, %15 : vector<8x128xf32>
    %c0_8 = arith.constant 0 : index
    %c0_9 = arith.constant 0 : index
    %17 = vector.load %arg3[%c0_8, %c0_9] : memref<8x128xf32, #tpu.memory_space<vmem>>, vector<8x128xf32>
    tpu.vector_store %arg3[%c0_8, %c0_9], %16 {strides = array<i32>} : memref<8x128xf32, #tpu.memory_space<vmem>>, vector<8x128xf32>,
    %c0_10 = arith.constant 0 : index
    %c0_11 = arith.constant 0 : index
    %18 = vector.load %arg4[%c0_10, %c0_11] : memref<8x128xf32, #tpu.memory_space<vmem>>, vector<8x128xf32>
    %19 = vector.shape_cast %12 : vector<16x128xf32> to vector<2x8x128xf32>
    %cst_12 = arith.constant dense<0.000000e+00> : vector<8x128xf32>
    %20 = vector.multi_reduction <add>, %19, %cst_12 [0] : vector<2x8x128xf32> to vector<8x128xf32>
    %21 = arith.addf %18, %20 : vector<8x128xf32>
    %c0_13 = arith.constant 0 : index
    %c0_14 = arith.constant 0 : index
    %22 = vector.load %arg4[%c0_13, %c0_14] : memref<8x128xf32, #tpu.memory_space<vmem>>, vector<8x128xf32>
    tpu.vector_store %arg4[%c0_13, %c0_14], %21 {strides = array<i32>} : memref<8x128xf32, #tpu.memory_space<vmem>>, vector<8x128xf32>,
    return
  }
  func.func @transform_0(%arg0: i32) -> (i32, i32) {
    %c0_i32 = arith.constant 0 : i32
    %c0_i32_0 = arith.constant 0 : i32
    return %arg0, %c0_i32 : i32, i32
  }
  func.func @transform_1(%arg0: i32) -> (i32, i32) {
    %c0_i32 = arith.constant 0 : i32
    %c0_i32_0 = arith.constant 0 : i32
    return %arg0, %c0_i32 : i32, i32
  }
  func.func @transform_2(%arg0: i32) -> (i32, i32) {
    %c0_i32 = arith.constant 0 : i32
    %c0_i32_0 = arith.constant 0 : i32
    %c0_i32_1 = arith.constant 0 : i32
    return %c0_i32, %c0_i32_0 : i32, i32
  }
  func.func @transform_3(%arg0: i32) -> (i32, i32) {
    %c0_i32 = arith.constant 0 : i32
    %c0_i32_0 = arith.constant 0 : i32
    %c0_i32_1 = arith.constant 0 : i32
    return %c0_i32, %c0_i32_0 : i32, i32
  }
}

</mosaic_0001>

<llo_original>
// kernel: tpu_custom_call.1
$region0: #{tpu_custom_call.1}
  #allocation0 [shape = 'u32[]', space=smem, size = 0x4, offset = 0x4, fixed_abs, tag = 'smem constant byte address 0x4 - core index']
  #allocation1 [shape = 'u32[144,128]{1,0:T(1,128)}', space=vmem, size = 0x12000, scoped, tag = 'internal scratch']
  %s0 = inlined_call_operand.hbm [shape: f32[16,128], index: 0, kind: input, shape index: {}]
  %s1 = inlined_call_operand.hbm [shape: f32[16,128], index: 1, kind: input, shape index: {}]
  %s2 = inlined_call_operand.hbm [shape: f32[8,128], index: 2, kind: output, shape index: {0}]
  %s3 = inlined_call_operand.hbm [shape: f32[8,128], index: 3, kind: output, shape index: {1}]
  %4 = xla_tuple %s2, %s3
  %s5 = sld [smem:[#allocation0]]
  $region38: #{tpu_custom_call.1} parent=0
    _
  %s7 = ssub.s32 1, %s5
  %s8 = scalar_select 0, %s7, %s5
  $region1: #{tpu_custom_call.1} parent=0
    #allocation2 [shape = 'u8[8192]{0}', space=vmem, size = 0x2000, scoped, tag = 'input window, operand 0, single buffered']
    #allocation3 [shape = 's32[1]{0}', space=sflag, size = 0x4, scoped, tag = 'scoped memory for tpu_custom_call.1']
    #allocation4 [shape = 's32[1]{0}', space=sflag, size = 0x4, scoped, tag = 'scoped memory for tpu_custom_call.1']
    #allocation5 [shape = 'u8[8192]{0}', space=vmem, size = 0x2000, scoped, tag = 'input window, operand 1, single buffered']
    #allocation6 [shape = 's32[1]{0}', space=sflag, size = 0x4, scoped, tag = 'scoped memory for tpu_custom_call.1']
    #allocation7 [shape = 'u8[4096]{0}', space=vmem, size = 0x1000, scoped, tag = 'output window, operand 0, single buffered']
    #allocation8 [shape = 'u8[4096]{0}', space=vmem, size = 0x1000, scoped, tag = 'output window, operand 1, single buffered']
    #allocation9 [shape = 's32[1]{0}', space=sflag, size = 0x4, scoped, tag = 'scoped memory for tpu_custom_call.1']
    %9 = vsyncpa [#allocation3], 0
    %10 = vsyncpa [#allocation6], 0
    %11 = vsyncpa [#allocation4], 0
    %12 = vsyncpa [#allocation9], 0
    // Predicated region
    $region2: #{tpu_custom_call.1} parent=1 // pred_check
      _
    $region3: #{tpu_custom_call.1} parent=1 // pred_check_branch
      %14 = sbr.rel (0) target = $region5
    $region4: #{tpu_custom_call.1} parent=1 // pred_region
      %s16 = ssub.s32 256, 256
      %17 = vsyncadd [#allocation3], %s16
      %s18 = sshll.u32 [#allocation2], 4
      %s19 = int_to_ptr.vmem [resolvable:$true] %s18
      %24 = dma.hbm_to_vmem [thread:$0]  %s0, 256, %s19, [#allocation3], 128, 128, 8
    $region5: #{tpu_custom_call.1} parent=1 // pred_fallthru
      _
    // Predicated region
    $region6: #{tpu_custom_call.1} parent=1 // pred_check
      _
    $region7: #{tpu_custom_call.1} parent=1 // pred_check_branch
      %26 = sbr.rel (0) target = $region9
    $region8: #{tpu_custom_call.1} parent=1 // pred_region
      %s28 = ssub.s32 256, 256
      %29 = vsyncadd [#allocation6], %s28
      %s30 = sshll.u32 [#allocation5], 4
      %s31 = int_to_ptr.vmem [resolvable:$true] %s30
      %36 = dma.hbm_to_vmem [thread:$0]  %s1, 256, %s31, [#allocation6], 128, 128, 8
    $region9: #{tpu_custom_call.1} parent=1 // pred_fallthru
      _
    // Predicated region
    $region10: #{tpu_custom_call.1} parent=1 // pred_check
      _
    $region11: #{tpu_custom_call.1} parent=1 // pred_check_branch
      %38 = sbr.rel (0) target = $region13
    $region12: #{tpu_custom_call.1} parent=1 // pred_region
      %39 = dma.done [#allocation3], 256
    $region13: #{tpu_custom_call.1} parent=1 // pred_fallthru
      _
    // Predicated region
    $region14: #{tpu_custom_call.1} parent=1 // pred_check
      _
    $region15: #{tpu_custom_call.1} parent=1 // pred_check_branch
      %41 = sbr.rel (0) target = $region17
    $region16: #{tpu_custom_call.1} parent=1 // pred_region
      %42 = dma.done [#allocation6], 256
    $region17: #{tpu_custom_call.1} parent=1 // pred_fallthru
      _
    %p43 = scmp.eq.s32.totalorder 0, 0
    // Predicated region
    $region18: #{tpu_custom_call.1} parent=1 // pred_check
      %p44 = pneg %p43
    $region19: #{tpu_custom_call.1} parent=1 // pred_check_branch
      %46 = sbr.rel (%p44) target = $region21
    $region20: #{tpu_custom_call.1} parent=1 // pred_region
      %47 = vst [vmem:[#allocation7] sm:$0xff] 0.0
      %48 = vst [vmem:[#allocation8] sm:$0xff] 0.0
    $region21: #{tpu_custom_call.1} parent=1 // pred_fallthru
      _
    %v49 = vld [vmem:[#allocation2] sm:$0xff]
    %v50 = vld [vmem:[#allocation2 + $0x8] sm:$0xff]
    %v51 = vld [vmem:[#allocation5] sm:$0xff]
    %v52 = vld [vmem:[#allocation5 + $0x8] sm:$0xff]
    %vm53 = vcmp.ne.f32.partialorder %v51, %v51
    %vm54 = vcmp.ne.f32.partialorder %v52, %v52
    %vm55 = vmxor %vm53, 1
    %vm56 = vmxor %vm54, 1
    %v57 = vsub.f32 %v49, %v51
    %v58 = vsub.f32 %v50, %v52
    %v59 = vand.u32 2147483647, %v57
    %v60 = vand.u32 2147483647, %v58
    %v61 = vsel %vm55, %v59, 0.0
    %v62 = vsel %vm56, %v60, 0.0
    %v63 = vsel %vm55, 1, 0
    %v64 = vsel %vm56, 1, 0
    %v65 = vcvt.s32.f32 %v63
    %v66 = vcvt.s32.f32 %v64
    %v67 = vld [vmem:[#allocation7] sm:$0xff]
    %v68 = vadd.f32 %v61, %v62
    %v69 = vadd.f32 %v67, %v68
    %70 = vst [vmem:[#allocation7] sm:$0xff] %v69
    %v71 = vld [vmem:[#allocation8] sm:$0xff]
    %v72 = vadd.f32 %v65, %v66
    %v73 = vadd.f32 %v71, %v72
    %74 = vst [vmem:[#allocation8] sm:$0xff] %v73
    // Predicated region
    $region22: #{tpu_custom_call.1} parent=1 // pred_check
      _
    $region23: #{tpu_custom_call.1} parent=1 // pred_check_branch
      %76 = sbr.rel (0) target = $region25
    $region24: #{tpu_custom_call.1} parent=1 // pred_region
      %s78 = ssub.s32 128, 128
      %79 = vsyncadd [#allocation4], %s78
      %s81 = sshll.u32 [#allocation7], 4
      %s82 = int_to_ptr.vmem [resolvable:$true] %s81
      %84 = dma.vmem_to_hbm [thread:$0]  %s82, 128, %s2, [#allocation4]
    $region25: #{tpu_custom_call.1} parent=1 // pred_fallthru
      _
    // Predicated region
    $region26: #{tpu_custom_call.1} parent=1 // pred_check
      _
    $region27: #{tpu_custom_call.1} parent=1 // pred_check_branch
      %86 = sbr.rel (0) target = $region29
    $region28: #{tpu_custom_call.1} parent=1 // pred_region
      %s88 = ssub.s32 128, 128
      %89 = vsyncadd [#allocation9], %s88
      %s91 = sshll.u32 [#allocation8], 4
      %s92 = int_to_ptr.vmem [resolvable:$true] %s91
      %94 = dma.vmem_to_hbm [thread:$0]  %s92, 128, %s3, [#allocation9]
    $region29: #{tpu_custom_call.1} parent=1 // pred_fallthru
      _
    // Predicated region
    $region30: #{tpu_custom_call.1} parent=1 // pred_check
      _
    $region31: #{tpu_custom_call.1} parent=1 // pred_check_branch
      %96 = sbr.rel (0) target = $region33
    $region32: #{tpu_custom_call.1} parent=1 // pred_region
      %97 = dma.done [#allocation4], 128
    $region33: #{tpu_custom_call.1} parent=1 // pred_fallthru
      _
    // Predicated region
    $region34: #{tpu_custom_call.1} parent=1 // pred_check
      _
    $region35: #{tpu_custom_call.1} parent=1 // pred_check_branch
      %99 = sbr.rel (0) target = $region37
    $region36: #{tpu_custom_call.1} parent=1 // pred_region
      %100 = dma.done [#allocation9], 128
    $region37: #{tpu_custom_call.1} parent=1 // pred_fallthru
      _
    %101 = vsyncpa [#allocation3], 1
    %102 = vsyncpa [#allocation6], 1
    %103 = vsyncpa [#allocation4], 1
    %104 = vsyncpa [#allocation9], 1

</llo_original>
